<compile_context>
chip_gen: v5e
topology: v5e:2x2
jax: 0.10.0
libtpu: 0.0.40
codegen_flags: <defaults>
</compile_context>

<pallas_src>
import functools

import jax
import jax.numpy as jnp
from jax import lax
from jax.experimental import pallas as pl
from jax.experimental.pallas import tpu as pltpu

BN_EPS = 1e-5
LAST_PAD = 128  # lane-dense padding for the final 3-channel 1x1 conv output


# ----------------------------------------------------------------------------
# pltpu.roll convention probe (run eagerly once, before any jit trace)
# ----------------------------------------------------------------------------
def _roll_probe_kernel(x_ref, o_ref):
    o_ref[...] = pltpu.roll(x_ref[...], 1, 0)


_ROLL_SIGN = None


def _get_roll_sign():
    """Determine pltpu.roll's shift convention once, eagerly, on device."""
    global _ROLL_SIGN
    if _ROLL_SIGN is None:
        x = jnp.arange(16 * 128, dtype=jnp.float32).reshape(16, 128)
        y = pl.pallas_call(
            _roll_probe_kernel,
            out_shape=jax.ShapeDtypeStruct(x.shape, x.dtype))(x)
        if bool(jnp.array_equal(y, jnp.roll(x, 1, axis=0))):
            # jnp convention: out[i] = in[i - shift] -> use shift = -off
            _ROLL_SIGN = -1
        elif bool(jnp.array_equal(y, jnp.roll(x, -1, axis=0))):
            _ROLL_SIGN = 1
        else:
            raise RuntimeError("pltpu.roll convention probe failed")
    return _ROLL_SIGN


# ----------------------------------------------------------------------------
# Fused stage kernel
#   grid = (n_stems, n_blocks):  stem axis is "parallel", block axis
#   "arbitrary".  The activation slab and the tap-validity masks live in VMEM
#   scratch across block iterations; the head runs under pl.when(blk==0) and
#   the optional tail 1x1 under the last block.
# ----------------------------------------------------------------------------
def _stage_kernel(*args, N, H, W, C, n_blocks, n_in, has_last, roll_sign):
    it = iter(args)
    xs = [next(it) for _ in range(n_in)]      # (N, Ki) bf16 head inputs
    hws = [next(it) for _ in range(n_in)]     # (Ki, C) bf16 head weights
    hb = next(it)                             # (1, C) f32
    gamma = next(it)                          # (1, C) f32
    beta = next(it)                           # (1, C) f32
    rw = next(it)                             # (2, 9C, C) bf16   (this block)
    rb = next(it)                             # (2, 1, C) f32     (this block)
    lw, lb = (next(it), next(it)) if has_last else (None, None)
    o_ref = next(it)
    act_ref = next(it)                        # (N, C)   f32 scratch
    lhs_ref = next(it)                        # (N, 9C)  bf16 scratch (fused-K LHS)
    mask_ref = next(it)                       # (N, 9C)  bf16 scratch (tap masks)

    blk = pl.program_id(1)

    @pl.when(blk == 0)
    def _init():
        # ---- per-tap boundary-validity masks, built once per stem ----------
        row = lax.broadcasted_iota(jnp.int32, (N, 1), 0)
        xpos = row % W
        ypos = (row // W) % H
        for t in range(9):
            dy, dx = t // 3 - 1, t % 3 - 1
            ok = jnp.ones((N, 1), jnp.bool_)
            if dy == -1:
                ok = jnp.logical_and(ok, ypos >= 1)
            if dy == 1:
                ok = jnp.logical_and(ok, ypos <= H - 2)
            if dx == -1:
                ok = jnp.logical_and(ok, xpos >= 1)
            if dx == 1:
                ok = jnp.logical_and(ok, xpos <= W - 2)
            m = jnp.broadcast_to(jnp.where(ok, 1.0, 0.0), (N, C))
            mask_ref[:, t * C:(t + 1) * C] = m.astype(jnp.bfloat16)

        # ---- head: (im2col'd 3x3 | 1x1) conv + BatchNorm + ReLU -------------
        h = None
        for x_r, w_r in zip(xs, hws):
            d = jnp.dot(x_r[...], w_r[...], preferred_element_type=jnp.float32)
            h = d if h is None else h + d
        h = h + hb[...]
        # training-mode BatchNorm2d over (B,H,W) per channel, f32 stats
        mean = jnp.mean(h, axis=0, keepdims=True)
        var = jnp.mean(jnp.square(h - mean), axis=0, keepdims=True)
        h = (h - mean) * lax.rsqrt(var + BN_EPS) * gamma[...] + beta[...]
        act_ref[...] = jnp.maximum(h, 0.0)

    def conv3x3(x_f32, w, bias):
        """3x3 'same' conv: fused-K (N,9C)x(9C,C) single MXU matmul.

        Each tap = XLU sublane rotate (f32) -> bf16 cast -> bf16 mask multiply
        -> store into its K chunk of the lhs scratch.
        """
        for t in range(9):
            off = (t // 3 - 1) * W + (t % 3 - 1)
            tap = x_f32 if off == 0 else pltpu.roll(
                x_f32, (roll_sign * off) % N, 0)
            lhs_ref[:, t * C:(t + 1) * C] = (
                tap.astype(jnp.bfloat16) * mask_ref[:, t * C:(t + 1) * C])
        return jnp.dot(lhs_ref[...], w,
                       preferred_element_type=jnp.float32) + bias

    # ---- one residual block:  x + conv(relu(conv(x))) ----------------------
    x = act_ref[...]
    h = jnp.maximum(conv3x3(x, rw[0], rb[0]), 0.0)
    act_ref[...] = x + conv3x3(h, rw[1], rb[1])

    @pl.when(blk == n_blocks - 1)
    def _tail():
        res = act_ref[...]
        if has_last:
            res = jnp.dot(res.astype(jnp.bfloat16), lw[...],
                          preferred_element_type=jnp.float32) + lb[...]
        o_ref[...] = res.astype(o_ref.dtype)


# ----------------------------------------------------------------------------
# Fused-stage wrapper
# ----------------------------------------------------------------------------
def fused_stage(xs, head_ws, head_b, gamma, beta, rb_w, rb_b,
                last_w=None, last_b=None, *, B, H, W,
                out_dtype=jnp.bfloat16):
    """All arrays carry a leading stem axis S (S=1 for single stages).

    xs:      list of (S, N, Ki) bf16 slabs
    head_ws: list of (S, Ki, C) bf16 weights
    rb_w:    (S, n_blocks*2, 9C, C) bf16   rb_b: (S, n_blocks*2, 1, C) f32
    """
    S = int(xs[0].shape[0])
    N = B * H * W
    C = int(rb_w.shape[-1])
    n_blocks = int(rb_w.shape[1]) // 2
    n_in = len(xs)
    has_last = last_w is not None
    Cout = int(last_w.shape[-1]) if has_last else C

    cmap = lambda s, b: (s, 0, 0)

    in_specs, args = [], []
    for x in xs:
        in_specs.append(pl.BlockSpec((None,) + tuple(x.shape[1:]), cmap))
        args.append(x)
    for w in head_ws:
        in_specs.append(pl.BlockSpec((None,) + tuple(w.shape[1:]), cmap))
        args.append(w)
    for v in (head_b, gamma, beta):
        in_specs.append(pl.BlockSpec((None, 1, C), cmap))
        args.append(v)
    in_specs.append(pl.BlockSpec((None, 2, 9 * C, C),
                                 lambda s, b: (s, b, 0, 0)))
    args.append(rb_w)
    in_specs.append(pl.BlockSpec((None, 2, 1, C),
                                 lambda s, b: (s, b, 0, 0)))
    args.append(rb_b)
    if has_last:
        in_specs.append(pl.BlockSpec((None, C, Cout), cmap))
        args.append(last_w)
        in_specs.append(pl.BlockSpec((None, 1, Cout), cmap))
        args.append(last_b)

    kern = functools.partial(
        _stage_kernel, N=N, H=H, W=W, C=C, n_blocks=n_blocks, n_in=n_in,
        has_last=has_last, roll_sign=_get_roll_sign())

    return pl.pallas_call(
        kern,
        out_shape=jax.ShapeDtypeStruct((S, N, Cout), out_dtype),
        grid=(S, n_blocks),
        in_specs=in_specs,
        out_specs=pl.BlockSpec((None, N, Cout), cmap),
        scratch_shapes=[pltpu.VMEM((N, C), jnp.float32),        # activation
                        pltpu.VMEM((N, 9 * C), jnp.bfloat16),   # fused-K LHS
                        pltpu.VMEM((N, 9 * C), jnp.bfloat16)],  # tap masks
        compiler_params=pltpu.CompilerParams(
            dimension_semantics=("parallel", "arbitrary"),
            vmem_limit_bytes=32 * 1024 * 1024),
    )(*args)


# ----------------------------------------------------------------------------
# Wrapper-side im2col (XLA glue for the stem convs)
# ----------------------------------------------------------------------------
def _im2col3x3(x):
    """(B,H,W,C) f32 -> (B*H*W, 9*C) bf16, tap-major / channel-minor."""
    B, H, W, C = x.shape
    xp = jnp.pad(x, ((0, 0), (1, 1), (1, 1), (0, 0)))
    cols = [xp[:, dy:dy + H, dx:dx + W, :]
            for dy in range(3) for dx in range(3)]
    out = jnp.concatenate(cols, axis=-1).reshape(B * H * W, 9 * C)
    return out.astype(jnp.bfloat16)


# ----------------------------------------------------------------------------
# Parameter construction (deterministic, synthetic)
# ----------------------------------------------------------------------------
def _spectral_normalize(w, key, n_iter=1, eps=1e-12):
    """PyTorch-style spectral norm: weight_mat = (Cout, Cin*kh*kw)."""
    cout = w.shape[-1]
    if w.ndim == 4:  # (kh, kw, Cin, Cout) -> (Cout, Cin*kh*kw)
        wmat = jnp.transpose(w, (3, 2, 0, 1)).reshape(cout, -1)
    else:            # (Cin, Cout) -> (Cout, Cin)
        wmat = w.T
    u = jax.random.normal(key, (cout,), jnp.float32)
    u = u / (jnp.linalg.norm(u) + eps)
    v = None
    for _ in range(n_iter):
        v = wmat.T @ u
        v = v / (jnp.linalg.norm(v) + eps)
        u = wmat @ v
        u = u / (jnp.linalg.norm(u) + eps)
    sigma = u @ (wmat @ v)
    return w / sigma


class _KeyGen:
    def __init__(self, key):
        self.key = key

    def __call__(self):
        self.key, sub = jax.random.split(self.key)
        return sub


def _conv_params(kg, kh, kw, cin, cout, spectral=True):
    fan_in = kh * kw * cin
    scale = 1.0 / jnp.sqrt(jnp.float32(fan_in))
    w = jax.random.normal(kg(), (kh, kw, cin, cout), jnp.float32) * scale
    b = jax.random.normal(kg(), (cout,), jnp.float32) * scale
    if spectral:
        w = _spectral_normalize(w, kg())
    if kh == 1 and kw == 1:
        w = w.reshape(cin, cout)
    return w, b


def _bn_params(c):
    return jnp.ones((1, c), jnp.float32), jnp.zeros((1, c), jnp.float32)


def _resblocks_params(kg, c, n):
    """Residual conv weights stored fused-K: (n*2, 9*c, c) bf16."""
    ws, bs = [], []
    for _ in range(n):
        for _conv in range(2):
            w, b = _conv_params(kg, 3, 3, c, c, spectral=False)
            ws.append(w.reshape(9 * c, c)[None])
            bs.append(b.reshape(1, 1, c))
    rw = jnp.concatenate(ws, axis=0).astype(jnp.bfloat16)   # (2n, 9c, c)
    rb = jnp.concatenate(bs, axis=0).astype(jnp.float32)    # (2n, 1, c)
    return rw, rb


def _stack_stems(stage_dicts):
    """Stack identically-shaped per-stem param dicts along a leading S axis."""
    out = {}
    for k in stage_dicts[0]:
        if k == "head_w":
            n = len(stage_dicts[0][k])
            out[k] = [jnp.stack([d[k][i] for d in stage_dicts], 0)
                      for i in range(n)]
        else:
            out[k] = jnp.stack([d[k] for d in stage_dicts], 0)
    return out


def init_params(key):
    kg = _KeyGen(key)

    def stem_stage(cin, c, n_blocks):
        w, b = _conv_params(kg, 3, 3, cin, c, spectral=True)
        g, bt = _bn_params(c)
        rw, rb = _resblocks_params(kg, c, n_blocks)
        return dict(head_w=[w.reshape(9 * cin, c).astype(jnp.bfloat16)],
                    head_b=b.reshape(1, c), gamma=g, beta=bt,
                    rb_w=rw, rb_b=rb)

    def mix_stage(cins, c, n_blocks, last=None):
        cin = sum(cins)
        w, b = _conv_params(kg, 1, 1, cin, c, spectral=True)   # (cin, c)
        w = w.astype(jnp.bfloat16)
        chunks, off = [], 0
        for ci in cins:                        # concat fused into the head
            chunks.append(w[off:off + ci])
            off += ci
        g, bt = _bn_params(c)
        rw, rb = _resblocks_params(kg, c, n_blocks)
        d = dict(head_w=chunks, head_b=b.reshape(1, c), gamma=g, beta=bt,
                 rb_w=rw, rb_b=rb)
        if last is not None:
            lw, lb = _conv_params(kg, 1, 1, c, last, spectral=False)
            lw = jnp.pad(lw, ((0, 0), (0, LAST_PAD - last)))   # lane-dense out
            lb = jnp.pad(lb, ((0, LAST_PAD - last),))
            d["last_w"] = lw.astype(jnp.bfloat16)
            d["last_b"] = lb.reshape(1, LAST_PAD)
        return d

    p = {}
    p["z"] = _stack_stems([stem_stage(1, 64, 5)])
    p["cam_img"] = _stack_stems([stem_stage(3, 128, 5),
                                 stem_stage(3, 128, 5)])
    p["mix1"] = _stack_stems([mix_stage([64, 128, 128], 256, 3)])
    p["mix2"] = _stack_stems([mix_stage([256], 128, 2)])
    p["mix3"] = _stack_stems([mix_stage([128], 64, 5, last=3)])
    return p


# ----------------------------------------------------------------------------
# Forward pass (Pallas)
# ----------------------------------------------------------------------------
def generator_forward(p, z, camera_info_tensor, input_img):
    """Inputs in NCHW (PyTorch convention); output in NCHW."""
    B, _, H, W = z.shape

    def to_nhwc(t):
        return jnp.transpose(t, (0, 2, 3, 1)).astype(jnp.float32)

    z9 = _im2col3x3(to_nhwc(z))[None]                              # (1, N, 9)
    ci9 = jnp.stack([_im2col3x3(to_nhwc(camera_info_tensor)),
                     _im2col3x3(to_nhwc(input_img))], axis=0)      # (2, N, 27)

    def run(xs, s, out_dtype=jnp.bfloat16):
        return fused_stage(xs, s["head_w"], s["head_b"], s["gamma"], s["beta"],
                           s["rb_w"], s["rb_b"],
                           s.get("last_w"), s.get("last_b"),
                           B=B, H=H, W=W, out_dtype=out_dtype)

    oz = run([z9], p["z"])                              # (1, N, 64)
    oci = run([ci9], p["cam_img"])                      # (2, N, 128) parallel stems
    o = run([oz, oci[0:1], oci[1:2]], p["mix1"])        # concat fused into head
    o = run([o], p["mix2"])                             # (1, N, 128)
    o = run([o], p["mix3"], out_dtype=jnp.float32)      # (1, N, 128) padded

    out = o[0, :, :3].reshape(B, H, W, 3)
    return jnp.transpose(out, (0, 3, 1, 2))


# ----------------------------------------------------------------------------
# Pure-jnp reference (mirrors the kernel math: bf16 matmul inputs, f32 accum)
# ----------------------------------------------------------------------------
def _stem_view(stage, i):
    return {k: ([w[i] for w in v] if k == "head_w" else v[i])
            for k, v in stage.items()}


def _ref_conv3x3_slab(x, w, b, B, H, W):
    C = x.shape[-1]
    cols = _im2col3x3(x.reshape(B, H, W, C))          # (N, 9C) bf16
    return jnp.dot(cols, w, preferred_element_type=jnp.float32) + b


def _ref_stage(xs, s, B, H, W, out_dtype):
    h = None
    for x, w in zip(xs, s["head_w"]):
        d = jnp.dot(x, w, preferred_element_type=jnp.float32)
        h = d if h is None else h + d
    h = h + s["head_b"]
    mean = jnp.mean(h, axis=0, keepdims=True)
    var = jnp.mean(jnp.square(h - mean), axis=0, keepdims=True)
    h = (h - mean) * lax.rsqrt(var + BN_EPS) * s["gamma"] + s["beta"]
    act = jnp.maximum(h, 0.0)

    rw, rbias = s["rb_w"], s["rb_b"]
    n_blocks = rbias.shape[0] // 2
    for blk in range(n_blocks):
        hh = jnp.maximum(
            _ref_conv3x3_slab(act, rw[2 * blk], rbias[2 * blk], B, H, W), 0.0)
        act = act + _ref_conv3x3_slab(hh, rw[2 * blk + 1], rbias[2 * blk + 1],
                                      B, H, W)

    if "last_w" in s:
        act = jnp.dot(act.astype(jnp.bfloat16), s["last_w"],
                      preferred_element_type=jnp.float32) + s["last_b"]
    return act.astype(out_dtype)


def generator_reference(p, z, camera_info_tensor, input_img):
    B, _, H, W = z.shape

    def to_nhwc(t):
        return jnp.transpose(t, (0, 2, 3, 1)).astype(jnp.float32)

    z9 = _im2col3x3(to_nhwc(z))
    c9 = _im2col3x3(to_nhwc(camera_info_tensor))
    i9 = _im2col3x3(to_nhwc(input_img))

    oz = _ref_stage([z9], _stem_view(p["z"], 0), B, H, W, jnp.bfloat16)
    oc = _ref_stage([c9], _stem_view(p["cam_img"], 0), B, H, W, jnp.bfloat16)
    oi = _ref_stage([i9], _stem_view(p["cam_img"], 1), B, H, W, jnp.bfloat16)
    o = _ref_stage([oz, oc, oi], _stem_view(p["mix1"], 0), B, H, W,
                   jnp.bfloat16)
    o = _ref_stage([o], _stem_view(p["mix2"], 0), B, H, W, jnp.bfloat16)
    o = _ref_stage([o], _stem_view(p["mix3"], 0), B, H, W, jnp.float32)
    out = o[:, :3].reshape(B, H, W, 3)
    return jnp.transpose(out, (0, 3, 1, 2))


# ----------------------------------------------------------------------------
if __name__ == "__main__":
    _get_roll_sign()   # probe pltpu.roll convention eagerly (tiny kernel)

    key = jax.random.PRNGKey(0)
    kp, kz, kc, ki = jax.random.split(key, 4)

    B, H, W = 2, 16, 16
    z = jax.random.normal(kz, (B, 1, H, W), jnp.float32)
    camera_info_tensor = jax.random.normal(kc, (B, 3, H, W), jnp.float32)
    input_img = jax.random.normal(ki, (B, 3, H, W), jnp.float32)

    params = init_params(kp)

    fwd = jax.jit(generator_forward)
    out = jax.block_until_ready(fwd(params, z, camera_info_tensor, input_img))

    assert out.shape == (B, 3, H, W), out.shape
    assert bool(jnp.all(jnp.isfinite(out)))

    # Cross-check against a pure-jnp reference that mirrors the kernel math
    # (same bf16 weights / bf16 matmul inputs, f32 accumulation).
    ref = jax.jit(generator_reference)(params, z, camera_info_tensor, input_img)
    rel = float(jnp.linalg.norm(out - ref) / (jnp.linalg.norm(ref) + 1e-12))
    assert rel < 1e-2, f"pallas/reference mismatch: rel={rel}"

    print("KERNEL_OK")
</pallas_src>

<mosaic_0001>
module attributes {stable_mosaic.version = 11 : i64} {
  func.func @_roll_probe_kernel(%arg0: memref<16x128xf32, #tpu.memory_space<vmem>>, %arg1: memref<16x128xf32, #tpu.memory_space<vmem>>) attributes {dimension_semantics = [], scalar_prefetch = 0 : i64, scratch_operands = 0 : i64, tpu.core_type = #tpu.core_type<tc>} {
    %c0 = arith.constant 0 : index
    %c0_0 = arith.constant 0 : index
    %0 = vector.load %arg0[%c0, %c0_0] : memref<16x128xf32, #tpu.memory_space<vmem>>, vector<16x128xf32>
    %c1_i32 = arith.constant 1 : i32
    %1 = tpu.dynamic_rotate %0 by %c1_i32 dim 0 : vector<16x128xf32>, i32 -> vector<16x128xf32>
    %c0_1 = arith.constant 0 : index
    %c0_2 = arith.constant 0 : index
    %2 = vector.load %arg1[%c0_1, %c0_2] : memref<16x128xf32, #tpu.memory_space<vmem>>, vector<16x128xf32>
    tpu.vector_store %arg1[%c0_1, %c0_2], %1 {strides = array<i32>} : memref<16x128xf32, #tpu.memory_space<vmem>>, vector<16x128xf32>,
    return
  }
}

</mosaic_0001>

<llo_original>
// kernel: tpu_custom_call.1
$region0: #{tpu_custom_call.1}
  #allocation0 [shape = 'u32[]', space=smem, size = 0x4, offset = 0x4, fixed_abs, tag = 'smem constant byte address 0x4 - core index']
  #allocation1 [shape = 'u32[72,128]{1,0:T(1,128)}', space=vmem, size = 0x9000, scoped, tag = 'internal scratch']
  %s0 = inlined_call_operand.hbm [shape: f32[16,128], index: 0, kind: input, shape index: {}]
  %s1 = inlined_call_operand.hbm [shape: f32[16,128], index: 1, kind: output, shape index: {}]
  %s2 = sld [smem:[#allocation0]]
  $region18: #{tpu_custom_call.1} parent=0
    _
  %s4 = ssub.s32 1, %s2
  %s5 = scalar_select 0, %s4, %s2
  $region1: #{tpu_custom_call.1} parent=0
    #allocation2 [shape = 'u8[8192]{0}', space=vmem, size = 0x2000, scoped, tag = 'input window, operand 0, single buffered']
    #allocation3 [shape = 's32[1]{0}', space=sflag, size = 0x4, scoped, tag = 'scoped memory for tpu_custom_call.1']
    #allocation4 [shape = 's32[1]{0}', space=sflag, size = 0x4, scoped, tag = 'scoped memory for tpu_custom_call.1']
    #allocation5 [shape = 'u8[8192]{0}', space=vmem, size = 0x2000, scoped, tag = 'output window, operand 0, single buffered']
    %6 = vsyncpa [#allocation3], 0
    %7 = vsyncpa [#allocation4], 0
    // Predicated region
    $region2: #{tpu_custom_call.1} parent=1 // pred_check
      _
    $region3: #{tpu_custom_call.1} parent=1 // pred_check_branch
      %9 = sbr.rel (0) target = $region5
    $region4: #{tpu_custom_call.1} parent=1 // pred_region
      %11 = vsyncadd [#allocation3], 0
      %s12 = sshll.u32 %s0, 4
      %s13 = int_to_ptr.hbm [resolvable:$true] %s12
      %s14 = sshll.u32 [#allocation2], 4
      %s15 = int_to_ptr.vmem [resolvable:$true] %s14
      %20 = dma.hbm_to_vmem [thread:$0]  %s13, 256, %s15, [#allocation3], 128, 128, 8
    $region5: #{tpu_custom_call.1} parent=1 // pred_fallthru
      _
    // Predicated region
    $region6: #{tpu_custom_call.1} parent=1 // pred_check
      _
    $region7: #{tpu_custom_call.1} parent=1 // pred_check_branch
      %22 = sbr.rel (0) target = $region9
    $region8: #{tpu_custom_call.1} parent=1 // pred_region
      %24 = dma.done [#allocation3], 256
    $region9: #{tpu_custom_call.1} parent=1 // pred_fallthru
      _
    %v25 = vld [vmem:[#allocation2] sm:$0xff]
    %v26 = vld [vmem:[#allocation2 + $0x8] sm:$0xff]
    %v27 = vrot.slane %v25, 7
    %v28 = vrot.slane %v26, 7
    %v29 = vlaneseq
    %v30 = vshrl.u32 %v29, 7
    %vm31 = vcmp.lt.s32.totalorder %v30, 1
    %v32 = vsel %vm31, %v27, %v28
    %v33 = vsel %vm31, %v28, %v27
    %34 = vst [vmem:[#allocation5] sm:$0xff] %v33
    %35 = vst [vmem:[#allocation5 + $0x8] sm:$0xff] %v32
    // Predicated region
    $region10: #{tpu_custom_call.1} parent=1 // pred_check
      _
    $region11: #{tpu_custom_call.1} parent=1 // pred_check_branch
      %37 = sbr.rel (0) target = $region13
    $region12: #{tpu_custom_call.1} parent=1 // pred_region
      %39 = vsyncadd [#allocation4], 0
      %s40 = sshll.u32 [#allocation5], 4
      %s41 = int_to_ptr.vmem [resolvable:$true] %s40
      %s42 = sshll.u32 %s1, 4
      %s43 = int_to_ptr.hbm [resolvable:$true] %s42
      %48 = dma.vmem_to_hbm [thread:$0]  %s41, 256, %s43, [#allocation4], 128, 128, 8
    $region13: #{tpu_custom_call.1} parent=1 // pred_fallthru
      _
    // Predicated region
    $region14: #{tpu_custom_call.1} parent=1 // pred_check
      _
    $region15: #{tpu_custom_call.1} parent=1 // pred_check_branch
      %50 = sbr.rel (0) target = $region17
    $region16: #{tpu_custom_call.1} parent=1 // pred_region
      %52 = dma.done [#allocation4], 256
    $region17: #{tpu_custom_call.1} parent=1 // pred_fallthru
      _
    %53 = vsyncpa [#allocation3], 1
    %54 = vsyncpa [#allocation4], 1

</llo_original>
